<compile_context>
chip_gen: v6e
topology: v6e:2x2x1
jax: 0.10.0
libtpu: 0.0.40
codegen_flags: <defaults>
</compile_context>

<pallas_src>
import jax
import jax.numpy as jnp
from jax.experimental import pallas as pl
from jax.experimental.pallas import tpu as pltpu


def _round_up(x: int, m: int) -> int:
    return ((x + m - 1) // m) * m


def _vmem_capacity_bytes() -> int:
    try:
        return int(pltpu.get_tpu_info().vmem_capacity_bytes)
    except Exception:
        return 128 << 20  # v5e / v6e default


def _softmax_rows(logits):
    """Numerically stable row softmax in f32 (logits already f32)."""
    m = jnp.max(logits, axis=-1, keepdims=True)
    e = jnp.exp(logits - m)
    denom = jnp.sum(e, axis=-1, keepdims=True)
    inv = pl.reciprocal(denom, approx=True)   # EUP slot (free-ish)
    inv = inv * (2.0 - denom * inv)           # one Newton step -> ~f32 accuracy
    return e * inv


def _make_resident_kernel(compute_dtype):
    """Path A: W fully VMEM-resident, one MXU matmul + fused softmax."""
    def kernel(x_ref, w_ref, b_ref, o_ref):
        x = x_ref[...].astype(compute_dtype)   # in-register cast (no extra HBM pass)
        w = w_ref[...].astype(compute_dtype)
        logits = jnp.dot(x, w, preferred_element_type=jnp.float32) + b_ref[...]
        o_ref[...] = _softmax_rows(logits).astype(o_ref.dtype)
    return kernel


def _make_ktiled_kernel(compute_dtype):
    """Path B: feature (K) reduction axis with an f32 accumulator scratch."""
    def kernel(x_ref, w_ref, b_ref, o_ref, acc_ref):
        k = pl.program_id(1)

        @pl.when(k == 0)
        def _():
            acc_ref[...] = jnp.zeros_like(acc_ref)

        x = x_ref[...].astype(compute_dtype)
        w = w_ref[...].astype(compute_dtype)
        acc_ref[...] += jnp.dot(x, w, preferred_element_type=jnp.float32)

        @pl.when(k == pl.num_programs(1) - 1)
        def _():
            logits = acc_ref[...] + b_ref[...]
            o_ref[...] = _softmax_rows(logits).astype(o_ref.dtype)
    return kernel


def _pick_tile_n(n, per_row_bytes, fixed_bytes, budget, tile_n_max):
    """Largest row tile fitting the per-chip VMEM budget, multiple of 8, and
    >= 2 grid steps when there is enough work (so v7x's two TCs both run)."""
    if n < 8:
        return n                     # full-dim exception: single (n, ...) block
    avail = max(budget - fixed_bytes, per_row_bytes * 8)
    t = avail // max(per_row_bytes, 1)
    t = min(int(t), tile_n_max, (n // 8) * 8)
    t = max((t // 8) * 8, 8)
    if pl.cdiv(n, t) < 2 and n >= 16:
        t = min(max(_round_up(pl.cdiv(n, 2), 8), 8), (n // 8) * 8)
    return t


def multinomial_regression_forward(
    x, w, b, *,
    compute_dtype=None,
    tile_n_max=2048,
    max_resident_w_bytes=None,
    slice_padded_classes=True,
):
    """Fused (x @ W + b) -> row softmax.

    x: (N, F), w: (F, C), b: (C,).  Returns (N, C) class probabilities, or
    (N, round_up(C, 128)) with zero-probability padded columns when
    slice_padded_classes=False (lets downstream consumers skip the slice).
    """
    n, f = x.shape
    f2, c = w.shape
    assert f == f2 and b.shape == (c,)

    out_dtype = x.dtype
    if compute_dtype is None:
        compute_dtype = x.dtype
    compute_dtype = jnp.dtype(compute_dtype)

    # Pad only the (small, reused) parameters on the class axis to a lane-dense
    # multiple of 128; padded class columns get a -1e30 bias -> exp underflows
    # to exactly 0 for them.  x itself is never copied or padded.
    c_pad = max(_round_up(c, 128), 128)
    w_cast = w.astype(compute_dtype)
    b_cast = b.astype(jnp.float32)
    if c_pad == c:
        w_p = w_cast
        b_p = b_cast.reshape(1, c_pad)
    else:
        w_p = jnp.zeros((f, c_pad), compute_dtype).at[:, :c].set(w_cast)
        b_p = jnp.full((1, c_pad), -1e30, jnp.float32).at[0, :c].set(b_cast)

    x_it = jnp.dtype(x.dtype).itemsize
    w_it = jnp.dtype(compute_dtype).itemsize
    o_it = jnp.dtype(out_dtype).itemsize

    # Per-chip VMEM sizing: ~36 MiB of live buffers on v7x (64 MiB physical),
    # ~100 MiB on v5e/v6e (128 MiB), with headroom for compiler scratch.
    vmem_cap = _vmem_capacity_bytes()
    budget = max(vmem_cap - (28 << 20), 16 << 20)

    resident_w_bytes = f * c_pad * w_it
    if max_resident_w_bytes is None:
        max_resident_w_bytes = budget // 2
    # K-tiling only when W can't comfortably stay resident AND F tiles cleanly
    # into multiples of 128 (so no x padding is ever needed).
    use_k_grid = (resident_w_bytes > max_resident_w_bytes
                  and f % 128 == 0 and f > 128)

    cost = pl.CostEstimate(
        flops=2 * n * f * c_pad,
        transcendentals=n * c_pad,
        bytes_accessed=(n * f * x_it + f * c_pad * w_it
                        + n * c_pad * o_it + 4 * c_pad),
    )

    def _run(single_buffer_resident):
        def resident_spec(shape, index_map):
            # Grid-invariant operands: single-buffer to halve their footprint.
            if single_buffer_resident:
                return pl.BlockSpec(shape, index_map,
                                    pipeline_mode=pl.Buffered(1))
            return pl.BlockSpec(shape, index_map)

        if not use_k_grid:
            # ---- Path A: resident W, 1-D row grid --------------------------
            fixed = 2 * resident_w_bytes + 2 * 8 * c_pad * 4   # W counted at 2x
            per_row = 2 * (f * x_it + c_pad * o_it)            # dbl-buffered x/out
            tile_n = _pick_tile_n(n, per_row, fixed, budget, tile_n_max)
            need = fixed + per_row * tile_n
            grid = (pl.cdiv(n, tile_n),)

            return pl.pallas_call(
                _make_resident_kernel(compute_dtype),
                out_shape=jax.ShapeDtypeStruct((n, c_pad), out_dtype),
                grid=grid,
                in_specs=[
                    pl.BlockSpec((tile_n, f), lambda i: (i, 0)),   # streamed rows
                    resident_spec((f, c_pad), lambda i: (0, 0)),   # resident W
                    resident_spec((1, c_pad), lambda i: (0, 0)),   # resident bias
                ],
                out_specs=pl.BlockSpec((tile_n, c_pad), lambda i: (i, 0)),
                compiler_params=pltpu.CompilerParams(
                    dimension_semantics=("parallel",),
                    vmem_limit_bytes=int(min(vmem_cap - (8 << 20),
                                             max(2 * need + (4 << 20), 32 << 20))),
                ),
                cost_estimate=cost,
            )(x, w_p, b_p)

        # ---- Path B: K-tiled reduction over features -----------------------
        tile_k = 128
        for cand in (2048, 1024, 512, 256, 128):
            if cand < f and f % cand == 0 and 2 * cand * c_pad * w_it <= budget // 2:
                tile_k = cand
                break
        k_steps = f // tile_k

        fixed = 2 * tile_k * c_pad * w_it + 2 * 8 * c_pad * 4
        per_row = 2 * tile_k * x_it + 2 * c_pad * o_it + c_pad * 4   # x, out, acc
        tile_n = _pick_tile_n(n, per_row, fixed, budget, tile_n_max)
        need = fixed + per_row * tile_n
        grid = (pl.cdiv(n, tile_n), k_steps)                          # K last

        return pl.pallas_call(
            _make_ktiled_kernel(compute_dtype),
            out_shape=jax.ShapeDtypeStruct((n, c_pad), out_dtype),
            grid=grid,
            in_specs=[
                pl.BlockSpec((tile_n, tile_k), lambda i, k: (i, k)),
                pl.BlockSpec((tile_k, c_pad), lambda i, k: (k, 0)),
                resident_spec((1, c_pad), lambda i, k: (0, 0)),
            ],
            out_specs=pl.BlockSpec((tile_n, c_pad), lambda i, k: (i, 0)),
            scratch_shapes=[pltpu.VMEM((tile_n, c_pad), jnp.float32)],
            compiler_params=pltpu.CompilerParams(
                dimension_semantics=("parallel", "arbitrary"),
                vmem_limit_bytes=int(min(vmem_cap - (8 << 20),
                                         max(2 * need + (4 << 20), 32 << 20))),
            ),
            cost_estimate=cost,
        )(x, w_p, b_p)

    try:
        out = _run(single_buffer_resident=True)
    except Exception:
        # Graceful fallback for JAX versions without BlockSpec(pipeline_mode=...):
        # default double-buffered resident operands (sizing already counts W at 2x).
        out = _run(single_buffer_resident=False)

    if slice_padded_classes and c_pad != c:
        out = out[:, :c]
    return out


def reference_forward(x, w, b):
    logits = x @ w + b[None, :]
    return jax.nn.softmax(logits, axis=-1)


if __name__ == "__main__":
    key = jax.random.PRNGKey(0)
    kx, kw, kb = jax.random.split(key, 3)

    # Small deterministic problem consistent with the module's
    # (n_samples, n_features) -> (n_samples, n_classes) forward.
    N, F, C = 8, 32, 16
    x = jax.random.normal(kx, (N, F), dtype=jnp.float32)
    w = 0.05 * jax.random.normal(kw, (F, C), dtype=jnp.float32)
    b = 0.01 * jax.random.normal(kb, (C,), dtype=jnp.float32)

    ref = reference_forward(x, w, b)

    # 1) Default f32 path (resident-W kernel).  Tolerance 2e-3: the XLA
    #    reference matmul may itself run in bf16-pass MXU mode at default
    #    precision, so exact 1e-5 agreement is not guaranteed by either side.
    probs = jax.block_until_ready(multinomial_regression_forward(x, w, b))
    assert probs.shape == (N, C)
    assert jnp.allclose(probs, ref, atol=2e-3), "f32 path mismatch vs reference"
    assert jnp.allclose(jnp.sum(probs, axis=-1), 1.0, atol=1e-4), "rows must sum to 1"

    # 2) bf16 MXU path (f32 accumulation + f32 softmax): looser tolerance.
    probs_bf16 = jax.block_until_ready(
        multinomial_regression_forward(x, w, b, compute_dtype=jnp.bfloat16))
    assert probs_bf16.shape == (N, C)
    assert jnp.allclose(probs_bf16, ref, atol=2e-2), "bf16 path mismatch vs reference"
    assert jnp.allclose(jnp.sum(probs_bf16, axis=-1), 1.0, atol=1e-4)

    # 3) K-tiled (feature-reduction) path, forced via max_resident_w_bytes so it
    #    is exercised even at these small shapes (2 K-steps x 2 row tiles).
    N2, F2, C2 = 32, 256, 16
    kx2, kw2, kb2 = jax.random.split(jax.random.PRNGKey(1), 3)
    x2 = jax.random.normal(kx2, (N2, F2), dtype=jnp.float32)
    w2 = 0.05 * jax.random.normal(kw2, (F2, C2), dtype=jnp.float32)
    b2 = 0.01 * jax.random.normal(kb2, (C2,), dtype=jnp.float32)
    probs2 = jax.block_until_ready(
        multinomial_regression_forward(x2, w2, b2, max_resident_w_bytes=1))
    assert probs2.shape == (N2, C2)
    assert jnp.allclose(probs2, reference_forward(x2, w2, b2), atol=2e-3)
    assert jnp.allclose(jnp.sum(probs2, axis=-1), 1.0, atol=1e-4)

    # TODO(synk): cross_entropy_loss (the training criterion) is not part of
    # the forward pass and is intentionally not implemented as a kernel.
    print("KERNEL_OK")
</pallas_src>

<mosaic_0001>
module attributes {stable_mosaic.version = 11 : i64} {
  func.func @kernel(%arg0: i32, %arg1: memref<8x32xf32, #tpu.memory_space<vmem>>, %arg2: memref<32x128xf32, #tpu.memory_space<vmem>>, %arg3: memref<1x128xf32, #tpu.memory_space<vmem>>, %arg4: memref<8x128xf32, #tpu.memory_space<vmem>>) attributes {dimension_semantics = [#tpu.dimension_semantics<parallel>], iteration_bounds = array<i64: 1>, scalar_prefetch = 0 : i64, scratch_operands = 0 : i64, tpu.core_type = #tpu.core_type<tc>, window_params = [{transform_indices = @transform_0, window_bounds = array<i64: 8, 32>}, {pipeline_mode = #tpu.pipeline_mode<synchronous>, transform_indices = @transform_1, window_bounds = array<i64: 32, 128>}, {pipeline_mode = #tpu.pipeline_mode<synchronous>, transform_indices = @transform_2, window_bounds = array<i64: 1, 128>}, {transform_indices = @transform_3, window_bounds = array<i64: 8, 128>}]} {
    %c0 = arith.constant 0 : index
    %c0_0 = arith.constant 0 : index
    %0 = vector.load %arg1[%c0, %c0_0] : memref<8x32xf32, #tpu.memory_space<vmem>>, vector<8x32xf32>
    %c0_1 = arith.constant 0 : index
    %c0_2 = arith.constant 0 : index
    %1 = vector.load %arg2[%c0_1, %c0_2] : memref<32x128xf32, #tpu.memory_space<vmem>>, vector<32x128xf32>
    %cst = arith.constant dense<0.000000e+00> : vector<8x128xf32>
    %2 = tpu.matmul %0, %1, %cst {dimension_numbers = #tpu.dot_dimension_numbers<[1], [0], [0], [1], [0, 0, 1, 1], [], []>} : vector<8x32xf32>, vector<32x128xf32>, vector<8x128xf32> -> vector<8x128xf32>
    %c0_3 = arith.constant 0 : index
    %c0_4 = arith.constant 0 : index
    %3 = vector.load %arg3[%c0_3, %c0_4] : memref<1x128xf32, #tpu.memory_space<vmem>>, vector<1x128xf32>
    %4 = vector.broadcast %3 : vector<1x128xf32> to vector<8x128xf32>
    %5 = arith.addf %2, %4 : vector<8x128xf32>
    %cst_5 = arith.constant dense<0xFF800000> : vector<8xf32>
    %6 = vector.multi_reduction <maximumf>, %5, %cst_5 [1] : vector<8x128xf32> to vector<8xf32>
    %7 = vector.shape_cast %6 : vector<8xf32> to vector<8x1xf32>
    %8 = vector.broadcast %7 : vector<8x1xf32> to vector<8x128xf32>
    %9 = arith.subf %5, %8 : vector<8x128xf32>
    %10 = math.exp %9 : vector<8x128xf32>
    %cst_6 = arith.constant dense<0.000000e+00> : vector<8xf32>
    %11 = vector.multi_reduction <add>, %10, %cst_6 [1] : vector<8x128xf32> to vector<8xf32>
    %12 = vector.shape_cast %11 : vector<8xf32> to vector<8x1xf32>
    %13 = tpu.reciprocal %12 {approx = true} : vector<8x1xf32> -> vector<8x1xf32>
    %14 = arith.mulf %12, %13 : vector<8x1xf32>
    %cst_7 = arith.constant 2.000000e+00 : f32
    %15 = vector.broadcast %cst_7 : f32 to vector<8x1xf32>
    %16 = arith.subf %15, %14 : vector<8x1xf32>
    %17 = arith.mulf %13, %16 : vector<8x1xf32>
    %18 = vector.broadcast %17 : vector<8x1xf32> to vector<8x128xf32>
    %19 = arith.mulf %10, %18 : vector<8x128xf32>
    %c0_8 = arith.constant 0 : index
    %c0_9 = arith.constant 0 : index
    %20 = vector.load %arg4[%c0_8, %c0_9] : memref<8x128xf32, #tpu.memory_space<vmem>>, vector<8x128xf32>
    tpu.vector_store %arg4[%c0_8, %c0_9], %19 {strides = array<i32>} : memref<8x128xf32, #tpu.memory_space<vmem>>, vector<8x128xf32>,
    return
  }
  func.func @transform_0(%arg0: i32) -> (i32, i32) {
    %c0_i32 = arith.constant 0 : i32
    %c0_i32_0 = arith.constant 0 : i32
    return %arg0, %c0_i32 : i32, i32
  }
  func.func @transform_1(%arg0: i32) -> (i32, i32) {
    %c0_i32 = arith.constant 0 : i32
    %c0_i32_0 = arith.constant 0 : i32
    %c0_i32_1 = arith.constant 0 : i32
    return %c0_i32, %c0_i32_0 : i32, i32
  }
  func.func @transform_2(%arg0: i32) -> (i32, i32) {
    %c0_i32 = arith.constant 0 : i32
    %c0_i32_0 = arith.constant 0 : i32
    %c0_i32_1 = arith.constant 0 : i32
    return %c0_i32, %c0_i32_0 : i32, i32
  }
  func.func @transform_3(%arg0: i32) -> (i32, i32) {
    %c0_i32 = arith.constant 0 : i32
    %c0_i32_0 = arith.constant 0 : i32
    return %arg0, %c0_i32 : i32, i32
  }
}

module attributes {stable_mosaic.version = 11 : i64} {
  func.func @kernel(%arg0: i32, %arg1: memref<8x32xf32, #tpu.memory_space<vmem>>, %arg2: memref<32x128xf32, #tpu.memory_space<vmem>>, %arg3: memref<1x128xf32, #tpu.memory_space<vmem>>, %arg4: memref<8x128xf32, #tpu.memory_space<vmem>>) attributes {dimension_semantics = [#tpu.dimension_semantics<parallel>], iteration_bounds = array<i64: 1>, scalar_prefetch = 0 : i64, scratch_operands = 0 : i64, tpu.core_type = #tpu.core_type<tc>, window_params = [{transform_indices = @transform_0, window_bounds = array<i64: 8, 32>}, {pipeline_mode = #tpu.pipeline_mode<synchronous>, transform_indices = @transform_1, window_bounds = array<i64: 32, 128>}, {pipeline_mode = #tpu.pipeline_mode<synchronous>, transform_indices = @transform_2, window_bounds = array<i64: 1, 128>}, {transform_indices = @transform_3, window_bounds = array<i64: 8, 128>}]} {
    %c0 = arith.constant 0 : index
    %c0_0 = arith.constant 0 : index
    %0 = vector.load %arg1[%c0, %c0_0] : memref<8x32xf32, #tpu.memory_space<vmem>>, vector<8x32xf32>
    %c0_1 = arith.constant 0 : index
    %c0_2 = arith.constant 0 : index
    %1 = vector.load %arg2[%c0_1, %c0_2] : memref<32x128xf32, #tpu.memory_space<vmem>>, vector<32x128xf32>
    %cst = arith.constant dense<0.000000e+00> : vector<8x128xf32>
    %2 = tpu.matmul %0, %1, %cst {dimension_numbers = #tpu.dot_dimension_numbers<[1], [0], [0], [1], [0, 0, 1, 1], [], []>} : vector<8x32xf32>, vector<32x128xf32>, vector<8x128xf32> -> vector<8x128xf32>
    %c0_3 = arith.constant 0 : index
    %c0_4 = arith.constant 0 : index
    %3 = vector.load %arg3[%c0_3, %c0_4] : memref<1x128xf32, #tpu.memory_space<vmem>>, vector<1x128xf32>
    %4 = vector.broadcast %3 : vector<1x128xf32> to vector<8x128xf32>
    %5 = arith.addf %2, %4 : vector<8x128xf32>
    %cst_5 = arith.constant dense<0xFF800000> : vector<8xf32>
    %6 = vector.multi_reduction <maximumf>, %5, %cst_5 [1] : vector<8x128xf32> to vector<8xf32>
    %7 = vector.shape_cast %6 : vector<8xf32> to vector<8x1xf32>
    %8 = vector.broadcast %7 : vector<8x1xf32> to vector<8x128xf32>
    %9 = arith.subf %5, %8 : vector<8x128xf32>
    %10 = math.exp %9 : vector<8x128xf32>
    %cst_6 = arith.constant dense<0.000000e+00> : vector<8xf32>
    %11 = vector.multi_reduction <add>, %10, %cst_6 [1] : vector<8x128xf32> to vector<8xf32>
    %12 = vector.shape_cast %11 : vector<8xf32> to vector<8x1xf32>
    %13 = tpu.reciprocal %12 {approx = true} : vector<8x1xf32> -> vector<8x1xf32>
    %14 = arith.mulf %12, %13 : vector<8x1xf32>
    %cst_7 = arith.constant 2.000000e+00 : f32
    %15 = vector.broadcast %cst_7 : f32 to vector<8x1xf32>
    %16 = arith.subf %15, %14 : vector<8x1xf32>
    %17 = arith.mulf %13, %16 : vector<8x1xf32>
    %18 = vector.broadcast %17 : vector<8x1xf32> to vector<8x128xf32>
    %19 = arith.mulf %10, %18 : vector<8x128xf32>
    %c0_8 = arith.constant 0 : index
    %c0_9 = arith.constant 0 : index
    %20 = vector.load %arg4[%c0_8, %c0_9] : memref<8x128xf32, #tpu.memory_space<vmem>>, vector<8x128xf32>
    tpu.vector_store %arg4[%c0_8, %c0_9], %19 {strides = array<i32>} : memref<8x128xf32, #tpu.memory_space<vmem>>, vector<8x128xf32>,
    return
  }
  func.func @transform_0(%arg0: i32) -> (i32, i32) {
    %c0_i32 = arith.constant 0 : i32
    %c0_i32_0 = arith.constant 0 : i32
    return %arg0, %c0_i32 : i32, i32
  }
  func.func @transform_1(%arg0: i32) -> (i32, i32) {
    %c0_i32 = arith.constant 0 : i32
    %c0_i32_0 = arith.constant 0 : i32
    %c0_i32_1 = arith.constant 0 : i32
    return %c0_i32, %c0_i32_0 : i32, i32
  }
  func.func @transform_2(%arg0: i32) -> (i32, i32) {
    %c0_i32 = arith.constant 0 : i32
    %c0_i32_0 = arith.constant 0 : i32
    %c0_i32_1 = arith.constant 0 : i32
    return %c0_i32, %c0_i32_0 : i32, i32
  }
  func.func @transform_3(%arg0: i32) -> (i32, i32) {
    %c0_i32 = arith.constant 0 : i32
    %c0_i32_0 = arith.constant 0 : i32
    return %arg0, %c0_i32 : i32, i32
  }
}

</mosaic_0001>

<llo_original>
// kernel: tpu_custom_call.1
$region0: #{tpu_custom_call.1}
  #allocation0 [shape = 'u32[]', space=smem, size = 0x4, offset = 0x4, fixed_abs, tag = 'smem constant byte address 0x4 - core index']
  #allocation1 [shape = 'u32[144,128]{1,0:T(1,128)}', space=vmem, size = 0x12000, scoped, tag = 'internal scratch']
  %s0 = inlined_call_operand.hbm [shape: f32[8,32], index: 0, kind: input, shape index: {}]
  %s1 = inlined_call_operand.hbm [shape: f32[32,128], index: 1, kind: input, shape index: {}]
  %s2 = inlined_call_operand.vmem [shape: f32[1,128], index: 2, kind: input, shape index: {}]
  %s3 = inlined_call_operand.hbm [shape: f32[8,128], index: 3, kind: output, shape index: {}]
  %s4 = sld [smem:[#allocation0]]
  $region30: #{tpu_custom_call.1} parent=0
    _
  %s6 = ssub.s32 1, %s4
  %s7 = scalar_select 0, %s6, %s4
  $region1: #{tpu_custom_call.1} parent=0
    #allocation2 [shape = 'u8[4096]{0}', space=vmem, size = 0x1000, scoped, tag = 'input window, operand 0, single buffered']
    #allocation3 [shape = 's32[1]{0}', space=sflag, size = 0x4, scoped, tag = 'scoped memory for tpu_custom_call.1']
    #allocation4 [shape = 's32[1]{0}', space=sflag, size = 0x4, scoped, tag = 'scoped memory for tpu_custom_call.1']
    #allocation5 [shape = 'u8[16384]{0}', space=vmem, size = 0x4000, scoped, tag = 'input window, operand 1, single buffered']
    #allocation6 [shape = 's32[1]{0}', space=sflag, size = 0x4, scoped, tag = 'scoped memory for tpu_custom_call.1']
    #allocation7 [shape = 'u8[4096]{0}', space=vmem, size = 0x1000, scoped, tag = 'output window, operand 0, single buffered']
    %8 = vsyncpa [#allocation3], 0
    %9 = vsyncpa [#allocation6], 0
    %10 = vsyncpa [#allocation4], 0
    // Predicated region
    $region2: #{tpu_custom_call.1} parent=1 // pred_check
      _
    $region3: #{tpu_custom_call.1} parent=1 // pred_check_branch
      %12 = sbr.rel (0) target = $region5
    $region4: #{tpu_custom_call.1} parent=1 // pred_region
      %s14 = ssub.s32 128, 128
      %15 = vsyncadd [#allocation3], %s14
      %s17 = sshll.u32 [#allocation2], 4
      %s18 = int_to_ptr.vmem [resolvable:$true] %s17
      %20 = dma.hbm_to_vmem [thread:$0]  %s0, 128, %s18, [#allocation3]
    $region5: #{tpu_custom_call.1} parent=1 // pred_fallthru
      _
    // Predicated region
    $region6: #{tpu_custom_call.1} parent=1 // pred_check
      _
    $region7: #{tpu_custom_call.1} parent=1 // pred_check_branch
      %22 = sbr.rel (0) target = $region9
    $region8: #{tpu_custom_call.1} parent=1 // pred_region
      %s24 = ssub.s32 512, 512
      %25 = vsyncadd [#allocation6], %s24
      %s26 = sshll.u32 [#allocation5], 4
      %s27 = int_to_ptr.vmem [resolvable:$true] %s26
      %32 = dma.hbm_to_vmem [thread:$0]  %s1, 512, %s27, [#allocation6], 128, 128, 8
    $region9: #{tpu_custom_call.1} parent=1 // pred_fallthru
      _
    // Predicated region
    $region10: #{tpu_custom_call.1} parent=1 // pred_check
      _
    $region11: #{tpu_custom_call.1} parent=1 // pred_check_branch
      %34 = sbr.rel (0) target = $region13
    $region12: #{tpu_custom_call.1} parent=1 // pred_region
      _
    $region13: #{tpu_custom_call.1} parent=1 // pred_fallthru
      _
    // Predicated region
    $region14: #{tpu_custom_call.1} parent=1 // pred_check
      _
    $region15: #{tpu_custom_call.1} parent=1 // pred_check_branch
      %36 = sbr.rel (0) target = $region17
    $region16: #{tpu_custom_call.1} parent=1 // pred_region
      %37 = dma.done [#allocation3], 128
    $region17: #{tpu_custom_call.1} parent=1 // pred_fallthru
      _
    // Predicated region
    $region18: #{tpu_custom_call.1} parent=1 // pred_check
      _
    $region19: #{tpu_custom_call.1} parent=1 // pred_check_branch
      %39 = sbr.rel (0) target = $region21
    $region20: #{tpu_custom_call.1} parent=1 // pred_region
      %40 = dma.done [#allocation6], 512
    $region21: #{tpu_custom_call.1} parent=1 // pred_fallthru
      _
    %v41 = vld [vmem:[#allocation2] sm:$0xff]
    %v42 = vld [vmem:[#allocation5] sm:$0xff]
    %v43 = vld [vmem:[#allocation5 + $0x8] sm:$0xff]
    %v44 = vld [vmem:[#allocation5 + $0x10] sm:$0xff]
    %v45 = vld [vmem:[#allocation5 + $0x18] sm:$0xff]
    %v46 = vld [vmem:[%s2] sm:$0x1]
    %v48 = vlaneseq
    %v49 = vshrl.u32 %v48, 7
    %v50 = vsub.s32 0, %v49
    %v51 = vrot.slane %v46, %v50
    %vm53 = vcmask 261120
    %v55 = vsel %vm53, %v41, 0
    %57 = vmatprep.subr.mxu0 0.0
    %58 = vmatpush1.msra.mxu0 0.0
    %59 = vmatprep.subr.mxu0 0.0
    %60 = vmatpush1.msra.mxu0 0.0
    %61 = vmatprep.subr.mxu0 0.0
    %62 = vmatpush1.msra.mxu0 0.0
    %63 = vmatprep.subr.mxu0 0.0
    %64 = vmatpush1.msra.mxu0 0.0
    %65 = vmatprep.subr.mxu0 0.0
    %66 = vmatpush1.msra.mxu0 0.0
    %67 = vmatprep.subr.mxu0 0.0
    %68 = vmatpush1.msra.mxu0 0.0
    %69 = vmatprep.subr.mxu0 0.0
    %70 = vmatpush1.msra.mxu0 0.0
    %71 = vmatprep.subr.mxu0 0.0
    %72 = vmatpush1.msra.mxu0 0.0
    %73 = vmatprep.subr.mxu0 0.0
    %74 = vmatpush1.msra.mxu0 0.0
    %75 = vmatprep.subr.mxu0 0.0
    %76 = vmatpush1.msra.mxu0 0.0
    %77 = vmatprep.subr.mxu0 0.0
    %78 = vmatpush1.msra.mxu0 0.0
    %79 = vmatprep.subr.mxu0 0.0
    %80 = vmatpush1.msra.mxu0 0.0
    %81 = vmatprep.subr.mxu0 0.0
    %82 = vmatpush1.msra.mxu0 %v45
    %83 = vmatprep.subr.mxu0 0.0
    %84 = vmatpush1.msra.mxu0 %v44
    %85 = vmatprep.subr.mxu0 0.0
    %86 = vmatpush1.msra.mxu0 %v43
    %87 = vmatprep.subr.mxu0 0.0
    %88 = vmatpush1.msra.mxu0 %v42
    %89 = vmatprep.subr.mxu0 0.0
    %90 = vmatpush2.msra.mxu0 0.0
    %91 = vmatprep.subr.mxu0 0.0
    %92 = vmatpush2.msra.mxu0 0.0
    %93 = vmatprep.subr.mxu0 0.0
    %94 = vmatpush2.msra.mxu0 0.0
    %95 = vmatprep.subr.mxu0 0.0
    %96 = vmatpush2.msra.mxu0 0.0
    %97 = vmatprep.subr.mxu0 0.0
    %98 = vmatpush2.msra.mxu0 0.0
    %99 = vmatprep.subr.mxu0 0.0
    %100 = vmatpush2.msra.mxu0 0.0
    %101 = vmatprep.subr.mxu0 0.0
    %102 = vmatpush2.msra.mxu0 0.0
    %103 = vmatprep.subr.mxu0 0.0
    %104 = vmatpush2.msra.mxu0 0.0
    %105 = vmatprep.subr.mxu0 0.0
    %106 = vmatpush2.msra.mxu0 0.0
    %107 = vmatprep.subr.mxu0 0.0
    %108 = vmatpush2.msra.mxu0 0.0
    %109 = vmatprep.subr.mxu0 0.0
    %110 = vmatpush2.msra.mxu0 0.0
    %111 = vmatprep.subr.mxu0 0.0
    %112 = vmatpush2.msra.mxu0 0.0
    %113 = vmatprep.subr.mxu0 0.0
    %114 = vmatpush2.msra.mxu0 0.0
    %115 = vmatprep.subr.mxu0 0.0
    %116 = vmatpush2.msra.mxu0 0.0
    %117 = vmatprep.subr.mxu0 0.0
    %118 = vmatpush2.msra.mxu0 0.0
    %119 = vmatprep.subr.mxu0 0.0
    %120 = vmatpush2.msra.mxu0 0.0
    %121 = vmatprep.mubr.f32.mxu0 0.0
    %122 = vmatmul.mubr.f32.gmra.mxu0 %v55
    %v123 = vpop.f32.mrf.mxu0
    %v124 = vadd.f32 %v51, %v123
    %v125 = vpop.f32.mrf.mxu0
    %126 = vdwg.mxu0
    %127 = vmax.xlane.f32.xlu0 %v124
    %v128 = vpop.xlane.xlu0 %127
    %v129 = vsub.f32 %v124, %v128
    %v130 = vmul.f32 %v129, 1.442695
    %v131 = vpow.pop %v130
    %132 = vadd.xlane.f32.xlu0 %v131
    %v133 = vpop.xlane.xlu0 %132
    %v134 = vrcp.pop %v133
    %v135 = vmul.f32 %v133, %v134
    %v136 = vsub.f32 2.0, %v135
    %v137 = vmul.f32 %v134, %v136
    %v138 = vmul.f32 %v131, %v137
    %139 = vst [vmem:[#allocation7] sm:$0xff] %v138
    // Predicated region
    $region22: #{tpu_custom_call.1} parent=1 // pred_check
      _
    $region23: #{tpu_custom_call.1} parent=1 // pred_check_branch
      %141 = sbr.rel (0) target = $region25
    $region24: #{tpu_custom_call.1} parent=1 // pred_region
      %s143 = ssub.s32 128, 128
      %144 = vsyncadd [#allocation4], %s143
      %s146 = sshll.u32 [#allocation7], 4
      %s147 = int_to_ptr.vmem [resolvable:$true] %s146
      %149 = dma.vmem_to_hbm [thread:$0]  %s147, 128, %s3, [#allocation4]
    $region25: #{tpu_custom_call.1} parent=1 // pred_fallthru
      _
    // Predicated region
    $region26: #{tpu_custom_call.1} parent=1 // pred_check
      _
    $region27: #{tpu_custom_call.1} parent=1 // pred_check_branch
      %151 = sbr.rel (0) target = $region29
    $region28: #{tpu_custom_call.1} parent=1 // pred_region
      %152 = dma.done [#allocation4], 128
    $region29: #{tpu_custom_call.1} parent=1 // pred_fallthru
      _
    %153 = vsyncpa [#allocation3], 1
    %154 = vsyncpa [#allocation6], 1
    %155 = vsyncpa [#allocation4], 1

// kernel: tpu_custom_call.1
$region0: #{tpu_custom_call.1}
  #allocation0 [shape = 'u32[]', space=smem, size = 0x4, offset = 0x4, fixed_abs, tag = 'smem constant byte address 0x4 - core index']
  #allocation1 [shape = 'u32[144,128]{1,0:T(1,128)}', space=vmem, size = 0x12000, scoped, tag = 'internal scratch']
  %s0 = inlined_call_operand.hbm [shape: f32[8,32], index: 0, kind: input, shape index: {}]
  %s1 = inlined_call_operand.hbm [shape: f32[32,128], index: 1, kind: input, shape index: {}]
  %s2 = inlined_call_operand.vmem [shape: f32[1,128], index: 2, kind: input, shape index: {}]
  %s3 = inlined_call_operand.hbm [shape: f32[8,128], index: 3, kind: output, shape index: {}]
  %s4 = sld [smem:[#allocation0]]
  $region30: #{tpu_custom_call.1} parent=0
    _
  %s6 = ssub.s32 1, %s4
  %s7 = scalar_select 0, %s6, %s4
  $region1: #{tpu_custom_call.1} parent=0
    #allocation2 [shape = 'u8[4096]{0}', space=vmem, size = 0x1000, scoped, tag = 'input window, operand 0, single buffered']
    #allocation3 [shape = 's32[1]{0}', space=sflag, size = 0x4, scoped, tag = 'scoped memory for tpu_custom_call.1']
    #allocation4 [shape = 's32[1]{0}', space=sflag, size = 0x4, scoped, tag = 'scoped memory for tpu_custom_call.1']
    #allocation5 [shape = 'u8[16384]{0}', space=vmem, size = 0x4000, scoped, tag = 'input window, operand 1, single buffered']
    #allocation6 [shape = 's32[1]{0}', space=sflag, size = 0x4, scoped, tag = 'scoped memory for tpu_custom_call.1']
    #allocation7 [shape = 'u8[4096]{0}', space=vmem, size = 0x1000, scoped, tag = 'output window, operand 0, single buffered']
    %8 = vsyncpa [#allocation3], 0
    %9 = vsyncpa [#allocation6], 0
    %10 = vsyncpa [#allocation4], 0
    // Predicated region
    $region2: #{tpu_custom_call.1} parent=1 // pred_check
      _
    $region3: #{tpu_custom_call.1} parent=1 // pred_check_branch
      %12 = sbr.rel (0) target = $region5
    $region4: #{tpu_custom_call.1} parent=1 // pred_region
      %s14 = ssub.s32 128, 128
      %15 = vsyncadd [#allocation3], %s14
      %s17 = sshll.u32 [#allocation2], 4
      %s18 = int_to_ptr.vmem [resolvable:$true] %s17
      %20 = dma.hbm_to_vmem [thread:$0]  %s0, 128, %s18, [#allocation3]
    $region5: #{tpu_custom_call.1} parent=1 // pred_fallthru
      _
    // Predicated region
    $region6: #{tpu_custom_call.1} parent=1 // pred_check
      _
    $region7: #{tpu_custom_call.1} parent=1 // pred_check_branch
      %22 = sbr.rel (0) target = $region9
    $region8: #{tpu_custom_call.1} parent=1 // pred_region
      %s24 = ssub.s32 512, 512
      %25 = vsyncadd [#allocation6], %s24
      %s26 = sshll.u32 [#allocation5], 4
      %s27 = int_to_ptr.vmem [resolvable:$true] %s26
      %32 = dma.hbm_to_vmem [thread:$0]  %s1, 512, %s27, [#allocation6], 128, 128, 8
    $region9: #{tpu_custom_call.1} parent=1 // pred_fallthru
      _
    // Predicated region
    $region10: #{tpu_custom_call.1} parent=1 // pred_check
      _
    $region11: #{tpu_custom_call.1} parent=1 // pred_check_branch
      %34 = sbr.rel (0) target = $region13
    $region12: #{tpu_custom_call.1} parent=1 // pred_region
      _
    $region13: #{tpu_custom_call.1} parent=1 // pred_fallthru
      _
    // Predicated region
    $region14: #{tpu_custom_call.1} parent=1 // pred_check
      _
    $region15: #{tpu_custom_call.1} parent=1 // pred_check_branch
      %36 = sbr.rel (0) target = $region17
    $region16: #{tpu_custom_call.1} parent=1 // pred_region
      %37 = dma.done [#allocation3], 128
    $region17: #{tpu_custom_call.1} parent=1 // pred_fallthru
      _
    // Predicated region
    $region18: #{tpu_custom_call.1} parent=1 // pred_check
      _
    $region19: #{tpu_custom_call.1} parent=1 // pred_check_branch
      %39 = sbr.rel (0) target = $region21
    $region20: #{tpu_custom_call.1} parent=1 // pred_region
      %40 = dma.done [#allocation6], 512
    $region21: #{tpu_custom_call.1} parent=1 // pred_fallthru
      _
    %v41 = vld [vmem:[#allocation2] sm:$0xff]
    %v42 = vld [vmem:[#allocation5] sm:$0xff]
    %v43 = vld [vmem:[#allocation5 + $0x8] sm:$0xff]
    %v44 = vld [vmem:[#allocation5 + $0x10] sm:$0xff]
    %v45 = vld [vmem:[#allocation5 + $0x18] sm:$0xff]
    %v46 = vld [vmem:[%s2] sm:$0x1]
    %v48 = vlaneseq
    %v49 = vshrl.u32 %v48, 7
    %v50 = vsub.s32 0, %v49
    %v51 = vrot.slane %v46, %v50
    %vm53 = vcmask 261120
    %v55 = vsel %vm53, %v41, 0
    %57 = vmatprep.subr.mxu0 0.0
    %58 = vmatpush1.msra.mxu0 0.0
    %59 = vmatprep.subr.mxu0 0.0
    %60 = vmatpush1.msra.mxu0 0.0
    %61 = vmatprep.subr.mxu0 0.0
    %62 = vmatpush1.msra.mxu0 0.0
    %63 = vmatprep.subr.mxu0 0.0
    %64 = vmatpush1.msra.mxu0 0.0
    %65 = vmatprep.subr.mxu0 0.0
    %66 = vmatpush1.msra.mxu0 0.0
    %67 = vmatprep.subr.mxu0 0.0
    %68 = vmatpush1.msra.mxu0 0.0
    %69 = vmatprep.subr.mxu0 0.0
    %70 = vmatpush1.msra.mxu0 0.0
    %71 = vmatprep.subr.mxu0 0.0
    %72 = vmatpush1.msra.mxu0 0.0
    %73 = vmatprep.subr.mxu0 0.0
    %74 = vmatpush1.msra.mxu0 0.0
    %75 = vmatprep.subr.mxu0 0.0
    %76 = vmatpush1.msra.mxu0 0.0
    %77 = vmatprep.subr.mxu0 0.0
    %78 = vmatpush1.msra.mxu0 0.0
    %79 = vmatprep.subr.mxu0 0.0
    %80 = vmatpush1.msra.mxu0 0.0
    %81 = vmatprep.subr.mxu0 0.0
    %82 = vmatpush1.msra.mxu0 %v45
    %83 = vmatprep.subr.mxu0 0.0
    %84 = vmatpush1.msra.mxu0 %v44
    %85 = vmatprep.subr.mxu0 0.0
    %86 = vmatpush1.msra.mxu0 %v43
    %87 = vmatprep.subr.mxu0 0.0
    %88 = vmatpush1.msra.mxu0 %v42
    %89 = vmatprep.subr.mxu0 0.0
    %90 = vmatpush2.msra.mxu0 0.0
    %91 = vmatprep.subr.mxu0 0.0
    %92 = vmatpush2.msra.mxu0 0.0
    %93 = vmatprep.subr.mxu0 0.0
    %94 = vmatpush2.msra.mxu0 0.0
    %95 = vmatprep.subr.mxu0 0.0
    %96 = vmatpush2.msra.mxu0 0.0
    %97 = vmatprep.subr.mxu0 0.0
    %98 = vmatpush2.msra.mxu0 0.0
    %99 = vmatprep.subr.mxu0 0.0
    %100 = vmatpush2.msra.mxu0 0.0
    %101 = vmatprep.subr.mxu0 0.0
    %102 = vmatpush2.msra.mxu0 0.0
    %103 = vmatprep.subr.mxu0 0.0
    %104 = vmatpush2.msra.mxu0 0.0
    %105 = vmatprep.subr.mxu0 0.0
    %106 = vmatpush2.msra.mxu0 0.0
    %107 = vmatprep.subr.mxu0 0.0
    %108 = vmatpush2.msra.mxu0 0.0
    %109 = vmatprep.subr.mxu0 0.0
    %110 = vmatpush2.msra.mxu0 0.0
    %111 = vmatprep.subr.mxu0 0.0
    %112 = vmatpush2.msra.mxu0 0.0
    %113 = vmatprep.subr.mxu0 0.0
    %114 = vmatpush2.msra.mxu0 0.0
    %115 = vmatprep.subr.mxu0 0.0
    %116 = vmatpush2.msra.mxu0 0.0
    %117 = vmatprep.subr.mxu0 0.0
    %118 = vmatpush2.msra.mxu0 0.0
    %119 = vmatprep.subr.mxu0 0.0
    %120 = vmatpush2.msra.mxu0 0.0
    %121 = vmatprep.mubr.f32.mxu0 0.0
    %122 = vmatmul.mubr.f32.gmra.mxu0 %v55
    %v123 = vpop.f32.mrf.mxu0
    %v124 = vadd.f32 %v51, %v123
    %v125 = vpop.f32.mrf.mxu0
    %126 = vdwg.mxu0
    %127 = vmax.xlane.f32.xlu0 %v124
    %v128 = vpop.xlane.xlu0 %127
    %v129 = vsub.f32 %v124, %v128
    %v130 = vmul.f32 %v129, 1.442695
    %v131 = vpow.pop %v130
    %132 = vadd.xlane.f32.xlu0 %v131
    %v133 = vpop.xlane.xlu0 %132
    %v134 = vrcp.pop %v133
    %v135 = vmul.f32 %v133, %v134
    %v136 = vsub.f32 2.0, %v135
    %v137 = vmul.f32 %v134, %v136
    %v138 = vmul.f32 %v131, %v137
    %139 = vst [vmem:[#allocation7] sm:$0xff] %v138
    // Predicated region
    $region22: #{tpu_custom_call.1} parent=1 // pred_check
      _
    $region23: #{tpu_custom_call.1} parent=1 // pred_check_branch
      %141 = sbr.rel (0) target = $region25
    $region24: #{tpu_custom_call.1} parent=1 // pred_region
      %s143 = ssub.s32 128, 128
      %144 = vsyncadd [#allocation4], %s143
      %s146 = sshll.u32 [#allocation7], 4
      %s147 = int_to_ptr.vmem [resolvable:$true] %s146
      %149 = dma.vmem_to_hbm [thread:$0]  %s147, 128, %s3, [#allocation4]
    $region25: #{tpu_custom_call.1} parent=1 // pred_fallthru
      _
    // Predicated region
    $region26: #{tpu_custom_call.1} parent=1 // pred_check
      _
    $region27: #{tpu_custom_call.1} parent=1 // pred_check_branch
      %151 = sbr.rel (0) target = $region29
    $region28: #{tpu_custom_call.1} parent=1 // pred_region
      %152 = dma.done [#allocation4], 128
    $region29: #{tpu_custom_call.1} parent=1 // pred_fallthru
      _
    %153 = vsyncpa [#allocation3], 1
    %154 = vsyncpa [#allocation6], 1
    %155 = vsyncpa [#allocation4], 1

</llo_original>
